<compile_context>
chip_gen: v5e
topology: v5e:2x2
jax: 0.10.0
libtpu: 0.0.40
codegen_flags: <defaults>
</compile_context>

<pallas_src>
import functools

import jax
import jax.numpy as jnp
from jax.experimental import pallas as pl
from jax.experimental.pallas import tpu as pltpu

VMEM_LIMIT = 32 * 1024 * 1024  # explicit scoped-VMEM limit (safe on v5e/v6e/v7x)


# ----------------------------------------------------------------------------
# Pallas kernels
# ----------------------------------------------------------------------------
def _conv_stats_kernel(p_ref, w_ref, out_ref, sum_ref, ssq_ref):
    """One lane-dense conv tile: (F, K) @ (K, tm) -> (F, tm), plus per-channel
    sum / sum-of-squares accumulation for training-mode BatchNorm."""
    t = pl.program_id(1)

    acc = jnp.dot(w_ref[...], p_ref[...],
                  preferred_element_type=jnp.float32)          # (F, tm)
    out_ref[...] = acc

    @pl.when(t == 0)
    def _init():
        sum_ref[...] = jnp.zeros_like(sum_ref)
        ssq_ref[...] = jnp.zeros_like(ssq_ref)

    s = jnp.sum(acc, axis=1, keepdims=True)                    # (F, 1)  (XLU)
    q = jnp.sum(acc * acc, axis=1, keepdims=True)              # (F, 1)
    sum_ref[...] += s[None]
    ssq_ref[...] += q[None]


def _bn_act_kernel(h_ref, scale_ref, shift_ref, o_ref):
    """y = relu(h * scale + shift); scale/shift fold mean/var/gamma/beta."""
    o_ref[...] = jnp.maximum(h_ref[...] * scale_ref[...] + shift_ref[...], 0.0)


def _res_head_kernel(h_ref, x_ref, w_ref, b_ref, scale_ref, shift_ref, o_ref):
    """Fused head: relu( BN2(h2) + (W_skip @ x_pool + b_skip) )."""
    skip = jnp.dot(w_ref[...], x_ref[...],
                   preferred_element_type=jnp.float32) + b_ref[...]
    bn = h_ref[...] * scale_ref[...] + shift_ref[...]
    o_ref[...] = jnp.maximum(bn + skip, 0.0)


# ----------------------------------------------------------------------------
# pallas_call wrappers
# ----------------------------------------------------------------------------
def _conv_stats(patches, w_mat, *, tm, n_split, tiles_per_split):
    kk, m_pad = patches.shape
    f = w_mat.shape[0]
    grid = (n_split, tiles_per_split)
    return pl.pallas_call(
        _conv_stats_kernel,
        out_shape=(
            jax.ShapeDtypeStruct((f, m_pad), jnp.float32),
            jax.ShapeDtypeStruct((n_split, f, 1), jnp.float32),
            jax.ShapeDtypeStruct((n_split, f, 1), jnp.float32),
        ),
        grid_spec=pltpu.PrefetchScalarGridSpec(
            num_scalar_prefetch=0,
            grid=grid,
            in_specs=[
                pl.BlockSpec((kk, tm), lambda s, t: (0, s * tiles_per_split + t)),
                pl.BlockSpec((f, kk), lambda s, t: (0, 0)),
            ],
            out_specs=[
                pl.BlockSpec((f, tm), lambda s, t: (0, s * tiles_per_split + t)),
                pl.BlockSpec((1, f, 1), lambda s, t: (s, 0, 0)),   # per-split accumulator
                pl.BlockSpec((1, f, 1), lambda s, t: (s, 0, 0)),   # per-split accumulator
            ],
        ),
        compiler_params=pltpu.CompilerParams(
            dimension_semantics=("parallel", "arbitrary"),
            vmem_limit_bytes=VMEM_LIMIT),
    )(patches, w_mat)


def _bn_act(h, scale, shift, *, tm):
    f, m_pad = h.shape
    return pl.pallas_call(
        _bn_act_kernel,
        out_shape=jax.ShapeDtypeStruct((f, m_pad), jnp.float32),
        grid_spec=pltpu.PrefetchScalarGridSpec(
            num_scalar_prefetch=0,
            grid=(m_pad // tm,),
            in_specs=[
                pl.BlockSpec((f, tm), lambda i: (0, i)),
                pl.BlockSpec((f, 1), lambda i: (0, 0)),
                pl.BlockSpec((f, 1), lambda i: (0, 0)),
            ],
            out_specs=pl.BlockSpec((f, tm), lambda i: (0, i)),
        ),
        compiler_params=pltpu.CompilerParams(
            dimension_semantics=("parallel",),
            vmem_limit_bytes=VMEM_LIMIT),
    )(h, scale, shift)


def _res_head(h2, x_pool, w_skip, b_skip, scale, shift, *, tm):
    f, m_pad = h2.shape
    c = x_pool.shape[0]
    return pl.pallas_call(
        _res_head_kernel,
        out_shape=jax.ShapeDtypeStruct((f, m_pad), jnp.float32),
        grid_spec=pltpu.PrefetchScalarGridSpec(
            num_scalar_prefetch=0,
            grid=(m_pad // tm,),
            in_specs=[
                pl.BlockSpec((f, tm), lambda i: (0, i)),
                pl.BlockSpec((c, tm), lambda i: (0, i)),
                pl.BlockSpec((f, c), lambda i: (0, 0)),
                pl.BlockSpec((f, 1), lambda i: (0, 0)),
                pl.BlockSpec((f, 1), lambda i: (0, 0)),
                pl.BlockSpec((f, 1), lambda i: (0, 0)),
            ],
            out_specs=pl.BlockSpec((f, tm), lambda i: (0, i)),
        ),
        compiler_params=pltpu.CompilerParams(
            dimension_semantics=("parallel",),
            vmem_limit_bytes=VMEM_LIMIT),
    )(h2, x_pool, w_skip, b_skip, scale, shift)


# ----------------------------------------------------------------------------
# Plain-JAX glue (layout plumbing)
# ----------------------------------------------------------------------------
def _round_up(v, m):
    return (v + m - 1) // m * m


def _pad2d(a, rows, cols):
    r, c = a.shape
    return jnp.pad(a, ((0, rows - r), (0, cols - c)))


def _maxpool2x2(x):
    n, c, h, w = x.shape
    x = x[:, :, : (h // 2) * 2, : (w // 2) * 2]
    return x.reshape(n, c, h // 2, 2, w // 2, 2).max(axis=(3, 5))


def _im2col_t(x_cnhw, k, padding):
    """(C, N, H, W) -> (C*k*k, N*H*W) patch matrix (stride 1, 'same' spatial)."""
    # TODO(synk): build the 3x3 patches in VMEM inside the conv kernel (halo DMA over
    # spatial row-blocks) to avoid the 9x im2col HBM blow-up — the main remaining cost
    # on v5e's ~820 GB/s HBM.
    c, n, h, w = x_cnhw.shape
    xp = jnp.pad(x_cnhw, ((0, 0), (0, 0), (padding, padding), (padding, padding)))
    taps = []
    for di in range(k):
        for dj in range(k):
            taps.append(xp[:, :, di:di + h, dj:dj + w])
    cols = jnp.stack(taps, axis=1)                  # (C, k*k, N, H, W)
    return cols.reshape(c * k * k, n * h * w)


def _fold_bn(sum_rows, ssq_rows, count, gamma, beta, eps):
    """Fold batch stats + affine params into per-channel scale/shift, shape (F, 1)."""
    total = jnp.sum(sum_rows, axis=0)               # (F, 1)
    total_sq = jnp.sum(ssq_rows, axis=0)            # (F, 1)
    mean = total / count
    # NOTE: E[x^2]-E[x]^2 can cancel for large-magnitude activations; clamp at 0.
    var = jnp.maximum(total_sq / count - mean * mean, 0.0)
    inv_std = jax.lax.rsqrt(var + eps)
    scale = gamma.reshape(-1, 1) * inv_std
    shift = beta.reshape(-1, 1) - mean * scale
    return scale, shift


def _pick_tile(m, kk_max, vmem_budget=8 * 1024 * 1024):
    m128 = _round_up(m, 128)
    for tm in (1024, 512, 256, 128):
        if tm <= m128 and kk_max * tm * 4 * 2 <= vmem_budget:
            return tm
    return 128


# ----------------------------------------------------------------------------
# Module forward
# ----------------------------------------------------------------------------
@jax.jit
def res_convdown_forward(x, w1, b1, g1, be1, w2, b2, g2, be2, w_skip, b_skip):
    """res_convdown forward (norm=BatchNorm2d training stats, act=ReLU, if_SN=False,
    dropout=None). b1/b2 (biases of the two 3x3 convs) are accepted for interface
    fidelity but are intentionally unused: training-mode BatchNorm cancels a
    per-channel bias exactly, so dropping them is a free micro-optimization."""
    del b1, b2
    eps = 1e-5
    n, c, _, _ = x.shape
    f = w1.shape[0]
    k = w1.shape[2]                                 # 3

    xp = _maxpool2x2(x)                             # (N, C, PH, PW)
    ph, pw = xp.shape[2], xp.shape[3]
    m = n * ph * pw
    x_t = xp.transpose(1, 0, 2, 3)                  # (C, N, PH, PW)

    kk1 = _round_up(c * k * k, 8)
    kk2 = _round_up(f * k * k, 8)
    tm = _pick_tile(m, max(kk1, kk2))
    m_pad = _round_up(m, tm)
    num_tiles = m_pad // tm
    n_split = 2 if num_tiles % 2 == 0 else 1        # 2-TC split of the stats pass (v7x)
    tps = num_tiles // n_split

    # ---- conv1 (3x3, no bias needed) + BN1 batch stats --------------------
    p1 = _pad2d(_im2col_t(x_t, k, 1), kk1, m_pad)            # (kk1, m_pad)
    w1m = _pad2d(w1.reshape(f, -1), f, kk1)                  # (F, kk1)
    conv1_out, s1, q1 = _conv_stats(p1, w1m, tm=tm, n_split=n_split,
                                    tiles_per_split=tps)
    scale1, shift1 = _fold_bn(s1, q1, m, g1, be1, eps)

    # ---- BN1 apply + ReLU --------------------------------------------------
    a1 = _bn_act(conv1_out, scale1, shift1, tm=tm)           # (F, m_pad)

    # ---- conv2 (3x3, no bias needed) + BN2 batch stats ---------------------
    a1_sp = a1[:, :m].reshape(f, n, ph, pw)
    p2 = _pad2d(_im2col_t(a1_sp, k, 1), kk2, m_pad)          # (kk2, m_pad)
    w2m = _pad2d(w2.reshape(f, -1), f, kk2)                  # (F, kk2)
    conv2_out, s2, q2 = _conv_stats(p2, w2m, tm=tm, n_split=n_split,
                                    tiles_per_split=tps)
    scale2, shift2 = _fold_bn(s2, q2, m, g2, be2, eps)

    # ---- fused head: 1x1 skip conv + bias + BN2 apply + residual + ReLU ----
    c_pad = _round_up(c, 8)
    x_flat = _pad2d(x_t.reshape(c, m), c_pad, m_pad)         # (c_pad, m_pad)
    w_skip_m = _pad2d(w_skip.reshape(f, c), f, c_pad)        # (F, c_pad)
    y = _res_head(conv2_out, x_flat, w_skip_m, b_skip.reshape(f, 1),
                  scale2, shift2, tm=tm)                     # (F, m_pad)

    return y[:, :m].reshape(f, n, ph, pw).transpose(1, 0, 2, 3)


# ----------------------------------------------------------------------------
# Reference (plain JAX) for sanity check
# ----------------------------------------------------------------------------
def _reference(x, w1, b1, g1, be1, w2, b2, g2, be2, w_skip, b_skip, eps=1e-5):
    xp = _maxpool2x2(x)

    def conv(x_, w_, b_, pad):
        y_ = jax.lax.conv_general_dilated(
            x_, w_, window_strides=(1, 1),
            padding=[(pad, pad), (pad, pad)],
            dimension_numbers=("NCHW", "OIHW", "NCHW"))
        return y_ + b_.reshape(1, -1, 1, 1)

    def bn(x_, g_, b_):
        mean = x_.mean(axis=(0, 2, 3), keepdims=True)
        var = x_.var(axis=(0, 2, 3), keepdims=True)          # biased (training BN)
        return ((x_ - mean) * jax.lax.rsqrt(var + eps)
                * g_.reshape(1, -1, 1, 1) + b_.reshape(1, -1, 1, 1))

    branch = jnp.maximum(bn(conv(xp, w1, b1, 1), g1, be1), 0.0)
    branch = bn(conv(branch, w2, b2, 1), g2, be2)
    skip = conv(xp, w_skip, b_skip, 0)
    return jnp.maximum(skip + branch, 0.0)


if __name__ == "__main__":
    # res_convdown(in_ch=4, out_ch=8) on x of shape (2, 4, 16, 16)
    N, C, H, W = 2, 4, 16, 16
    F_OUT, K = 8, 3

    key = jax.random.PRNGKey(0)
    ks = jax.random.split(key, 10)

    x = jax.random.normal(ks[0], (N, C, H, W), dtype=jnp.float32)
    w1 = jax.random.normal(ks[1], (F_OUT, C, K, K), jnp.float32) * jnp.sqrt(2.0 / (C * K * K))
    b1 = 0.01 * jax.random.normal(ks[2], (F_OUT,), jnp.float32)
    g1 = 1.0 + 0.05 * jax.random.normal(ks[3], (F_OUT,), jnp.float32)
    be1 = 0.05 * jax.random.normal(ks[4], (F_OUT,), jnp.float32)
    w2 = jax.random.normal(ks[5], (F_OUT, F_OUT, K, K), jnp.float32) * jnp.sqrt(2.0 / (F_OUT * K * K))
    b2 = 0.01 * jax.random.normal(ks[6], (F_OUT,), jnp.float32)
    g2 = 1.0 + 0.05 * jax.random.normal(ks[7], (F_OUT,), jnp.float32)
    be2 = 0.05 * jax.random.normal(ks[8], (F_OUT,), jnp.float32)
    w_skip = jax.random.normal(ks[9], (F_OUT, C, 1, 1), jnp.float32) * jnp.sqrt(2.0 / C)
    b_skip = 0.01 * jnp.arange(F_OUT, dtype=jnp.float32)

    out = res_convdown_forward(x, w1, b1, g1, be1, w2, b2, g2, be2, w_skip, b_skip)
    out = jax.block_until_ready(out)

    ref = _reference(x, w1, b1, g1, be1, w2, b2, g2, be2, w_skip, b_skip)
    assert out.shape == (N, F_OUT, H // 2, W // 2), out.shape
    max_err = float(jnp.max(jnp.abs(out - ref)))
    assert jnp.allclose(out, ref, atol=5e-4, rtol=5e-4), max_err

    print("KERNEL_OK")
</pallas_src>

<mosaic_0001>
module attributes {stable_mosaic.version = 11 : i64} {
  func.func @_conv_stats_kernel(%arg0: i32, %arg1: i32, %arg2: memref<40x128xf32, #tpu.memory_space<vmem>>, %arg3: memref<8x40xf32, #tpu.memory_space<vmem>>, %arg4: memref<8x128xf32, #tpu.memory_space<vmem>>, %arg5: memref<1x8x1xf32, #tpu.memory_space<vmem>>, %arg6: memref<1x8x1xf32, #tpu.memory_space<vmem>>) attributes {dimension_semantics = [#tpu.dimension_semantics<parallel>, #tpu.dimension_semantics<arbitrary>], iteration_bounds = array<i64: 1, 1>, scalar_prefetch = 0 : i64, scratch_operands = 0 : i64, tpu.core_type = #tpu.core_type<tc>, window_params = [{transform_indices = @transform_0, window_bounds = array<i64: 40, 128>}, {pipeline_mode = #tpu.pipeline_mode<synchronous>, transform_indices = @transform_1, window_bounds = array<i64: 8, 40>}, {transform_indices = @transform_2, window_bounds = array<i64: 8, 128>}, {transform_indices = @transform_3, window_bounds = array<i64: 1, 8, 1>}, {transform_indices = @transform_4, window_bounds = array<i64: 1, 8, 1>}]} {
    %c0 = arith.constant 0 : index
    %c0_0 = arith.constant 0 : index
    %0 = vector.load %arg3[%c0, %c0_0] : memref<8x40xf32, #tpu.memory_space<vmem>>, vector<8x40xf32>
    %c0_1 = arith.constant 0 : index
    %c0_2 = arith.constant 0 : index
    %1 = vector.load %arg2[%c0_1, %c0_2] : memref<40x128xf32, #tpu.memory_space<vmem>>, vector<40x128xf32>
    %cst = arith.constant dense<0.000000e+00> : vector<8x128xf32>
    %2 = tpu.matmul %0, %1, %cst {dimension_numbers = #tpu.dot_dimension_numbers<[1], [0], [0], [1], [0, 0, 1, 1], [], []>} : vector<8x40xf32>, vector<40x128xf32>, vector<8x128xf32> -> vector<8x128xf32>
    %c0_3 = arith.constant 0 : index
    %c0_4 = arith.constant 0 : index
    %3 = vector.load %arg4[%c0_3, %c0_4] : memref<8x128xf32, #tpu.memory_space<vmem>>, vector<8x128xf32>
    tpu.vector_store %arg4[%c0_3, %c0_4], %2 {strides = array<i32>} : memref<8x128xf32, #tpu.memory_space<vmem>>, vector<8x128xf32>,
    %c0_i32 = arith.constant 0 : i32
    %4 = arith.cmpi eq, %arg1, %c0_i32 : i32
    %5 = arith.extui %4 : i1 to i32
    %c0_i32_5 = arith.constant 0 : i32
    %6 = arith.cmpi ne, %5, %c0_i32_5 : i32
    scf.if %6 {
      %cst_20 = arith.constant 0.000000e+00 : f32
      %20 = vector.broadcast %cst_20 : f32 to vector<1x8x1xf32>
      %c0_21 = arith.constant 0 : index
      %c0_22 = arith.constant 0 : index
      %c0_23 = arith.constant 0 : index
      %21 = vector.load %arg5[%c0_21, %c0_22, %c0_23] : memref<1x8x1xf32, #tpu.memory_space<vmem>>, vector<1x8x1xf32>
      tpu.vector_store %arg5[%c0_21, %c0_22, %c0_23], %20 {strides = array<i32>} : memref<1x8x1xf32, #tpu.memory_space<vmem>>, vector<1x8x1xf32>,
      %cst_24 = arith.constant 0.000000e+00 : f32
      %22 = vector.broadcast %cst_24 : f32 to vector<1x8x1xf32>
      %c0_25 = arith.constant 0 : index
      %c0_26 = arith.constant 0 : index
      %c0_27 = arith.constant 0 : index
      %23 = vector.load %arg6[%c0_25, %c0_26, %c0_27] : memref<1x8x1xf32, #tpu.memory_space<vmem>>, vector<1x8x1xf32>
      tpu.vector_store %arg6[%c0_25, %c0_26, %c0_27], %22 {strides = array<i32>} : memref<1x8x1xf32, #tpu.memory_space<vmem>>, vector<1x8x1xf32>,
    } else {
    }
    %cst_6 = arith.constant dense<0.000000e+00> : vector<8xf32>
    %7 = vector.multi_reduction <add>, %2, %cst_6 [1] : vector<8x128xf32> to vector<8xf32>
    %8 = vector.shape_cast %7 : vector<8xf32> to vector<8x1xf32>
    %9 = arith.mulf %2, %2 : vector<8x128xf32>
    %cst_7 = arith.constant dense<0.000000e+00> : vector<8xf32>
    %10 = vector.multi_reduction <add>, %9, %cst_7 [1] : vector<8x128xf32> to vector<8xf32>
    %11 = vector.shape_cast %10 : vector<8xf32> to vector<8x1xf32>
    %c0_8 = arith.constant 0 : index
    %c0_9 = arith.constant 0 : index
    %c0_10 = arith.constant 0 : index
    %12 = vector.load %arg5[%c0_8, %c0_9, %c0_10] : memref<1x8x1xf32, #tpu.memory_space<vmem>>, vector<1x8x1xf32>
    %13 = vector.shape_cast %8 : vector<8x1xf32> to vector<1x8x1xf32>
    %14 = arith.addf %12, %13 : vector<1x8x1xf32>
    %c0_11 = arith.constant 0 : index
    %c0_12 = arith.constant 0 : index
    %c0_13 = arith.constant 0 : index
    %15 = vector.load %arg5[%c0_11, %c0_12, %c0_13] : memref<1x8x1xf32, #tpu.memory_space<vmem>>, vector<1x8x1xf32>
    tpu.vector_store %arg5[%c0_11, %c0_12, %c0_13], %14 {strides = array<i32>} : memref<1x8x1xf32, #tpu.memory_space<vmem>>, vector<1x8x1xf32>,
    %c0_14 = arith.constant 0 : index
    %c0_15 = arith.constant 0 : index
    %c0_16 = arith.constant 0 : index
    %16 = vector.load %arg6[%c0_14, %c0_15, %c0_16] : memref<1x8x1xf32, #tpu.memory_space<vmem>>, vector<1x8x1xf32>
    %17 = vector.shape_cast %11 : vector<8x1xf32> to vector<1x8x1xf32>
    %18 = arith.addf %16, %17 : vector<1x8x1xf32>
    %c0_17 = arith.constant 0 : index
    %c0_18 = arith.constant 0 : index
    %c0_19 = arith.constant 0 : index
    %19 = vector.load %arg6[%c0_17, %c0_18, %c0_19] : memref<1x8x1xf32, #tpu.memory_space<vmem>>, vector<1x8x1xf32>
    tpu.vector_store %arg6[%c0_17, %c0_18, %c0_19], %18 {strides = array<i32>} : memref<1x8x1xf32, #tpu.memory_space<vmem>>, vector<1x8x1xf32>,
    return
  }
  func.func @transform_0(%arg0: i32, %arg1: i32) -> (i32, i32) {
    %c1_i32 = arith.constant 1 : i32
    %0 = arith.muli %arg0, %c1_i32 : i32
    %1 = arith.addi %0, %arg1 : i32
    %c0_i32 = arith.constant 0 : i32
    %c0_i32_0 = arith.constant 0 : i32
    return %c0_i32, %1 : i32, i32
  }
  func.func @transform_1(%arg0: i32, %arg1: i32) -> (i32, i32) {
    %c0_i32 = arith.constant 0 : i32
    %c0_i32_0 = arith.constant 0 : i32
    %c0_i32_1 = arith.constant 0 : i32
    return %c0_i32, %c0_i32_0 : i32, i32
  }
  func.func @transform_2(%arg0: i32, %arg1: i32) -> (i32, i32) {
    %c1_i32 = arith.constant 1 : i32
    %0 = arith.muli %arg0, %c1_i32 : i32
    %1 = arith.addi %0, %arg1 : i32
    %c0_i32 = arith.constant 0 : i32
    %c0_i32_0 = arith.constant 0 : i32
    return %c0_i32, %1 : i32, i32
  }
  func.func @transform_3(%arg0: i32, %arg1: i32) -> (i32, i32, i32) {
    %c0_i32 = arith.constant 0 : i32
    %c0_i32_0 = arith.constant 0 : i32
    %c0_i32_1 = arith.constant 0 : i32
    return %arg0, %c0_i32, %c0_i32_0 : i32, i32, i32
  }
  func.func @transform_4(%arg0: i32, %arg1: i32) -> (i32, i32, i32) {
    %c0_i32 = arith.constant 0 : i32
    %c0_i32_0 = arith.constant 0 : i32
    %c0_i32_1 = arith.constant 0 : i32
    return %arg0, %c0_i32, %c0_i32_0 : i32, i32, i32
  }
}

module attributes {stable_mosaic.version = 11 : i64} {
  func.func @_bn_act_kernel(%arg0: i32, %arg1: memref<8x128xf32, #tpu.memory_space<vmem>>, %arg2: memref<8x1xf32, #tpu.memory_space<vmem>>, %arg3: memref<8x1xf32, #tpu.memory_space<vmem>>, %arg4: memref<8x128xf32, #tpu.memory_space<vmem>>) attributes {dimension_semantics = [#tpu.dimension_semantics<parallel>], iteration_bounds = array<i64: 1>, scalar_prefetch = 0 : i64, scratch_operands = 0 : i64, tpu.core_type = #tpu.core_type<tc>, window_params = [{transform_indices = @transform_0, window_bounds = array<i64: 8, 128>}, {pipeline_mode = #tpu.pipeline_mode<synchronous>, transform_indices = @transform_1, window_bounds = array<i64: 8, 1>}, {pipeline_mode = #tpu.pipeline_mode<synchronous>, transform_indices = @transform_2, window_bounds = array<i64: 8, 1>}, {transform_indices = @transform_3, window_bounds = array<i64: 8, 128>}]} {
    %c0 = arith.constant 0 : index
    %c0_0 = arith.constant 0 : index
    %0 = vector.load %arg1[%c0, %c0_0] : memref<8x128xf32, #tpu.memory_space<vmem>>, vector<8x128xf32>
    %c0_1 = arith.constant 0 : index
    %c0_2 = arith.constant 0 : index
    %1 = vector.load %arg2[%c0_1, %c0_2] : memref<8x1xf32, #tpu.memory_space<vmem>>, vector<8x1xf32>
    %2 = vector.broadcast %1 : vector<8x1xf32> to vector<8x128xf32>
    %3 = arith.mulf %0, %2 : vector<8x128xf32>
    %c0_3 = arith.constant 0 : index
    %c0_4 = arith.constant 0 : index
    %4 = vector.load %arg3[%c0_3, %c0_4] : memref<8x1xf32, #tpu.memory_space<vmem>>, vector<8x1xf32>
    %5 = vector.broadcast %4 : vector<8x1xf32> to vector<8x128xf32>
    %6 = arith.addf %3, %5 : vector<8x128xf32>
    %cst = arith.constant 0.000000e+00 : f32
    %7 = vector.broadcast %cst : f32 to vector<8x128xf32>
    %8 = arith.maximumf %6, %7 : vector<8x128xf32>
    %c0_5 = arith.constant 0 : index
    %c0_6 = arith.constant 0 : index
    %9 = vector.load %arg4[%c0_5, %c0_6] : memref<8x128xf32, #tpu.memory_space<vmem>>, vector<8x128xf32>
    tpu.vector_store %arg4[%c0_5, %c0_6], %8 {strides = array<i32>} : memref<8x128xf32, #tpu.memory_space<vmem>>, vector<8x128xf32>,
    return
  }
  func.func @transform_0(%arg0: i32) -> (i32, i32) {
    %c0_i32 = arith.constant 0 : i32
    %c0_i32_0 = arith.constant 0 : i32
    return %c0_i32, %arg0 : i32, i32
  }
  func.func @transform_1(%arg0: i32) -> (i32, i32) {
    %c0_i32 = arith.constant 0 : i32
    %c0_i32_0 = arith.constant 0 : i32
    %c0_i32_1 = arith.constant 0 : i32
    return %c0_i32, %c0_i32_0 : i32, i32
  }
  func.func @transform_2(%arg0: i32) -> (i32, i32) {
    %c0_i32 = arith.constant 0 : i32
    %c0_i32_0 = arith.constant 0 : i32
    %c0_i32_1 = arith.constant 0 : i32
    return %c0_i32, %c0_i32_0 : i32, i32
  }
  func.func @transform_3(%arg0: i32) -> (i32, i32) {
    %c0_i32 = arith.constant 0 : i32
    %c0_i32_0 = arith.constant 0 : i32
    return %c0_i32, %arg0 : i32, i32
  }
}

module attributes {stable_mosaic.version = 11 : i64} {
  func.func @_res_head_kernel(%arg0: i32, %arg1: memref<8x128xf32, #tpu.memory_space<vmem>>, %arg2: memref<8x128xf32, #tpu.memory_space<vmem>>, %arg3: memref<8x8xf32, #tpu.memory_space<vmem>>, %arg4: memref<8x1xf32, #tpu.memory_space<vmem>>, %arg5: memref<8x1xf32, #tpu.memory_space<vmem>>, %arg6: memref<8x1xf32, #tpu.memory_space<vmem>>, %arg7: memref<8x128xf32, #tpu.memory_space<vmem>>) attributes {dimension_semantics = [#tpu.dimension_semantics<parallel>], iteration_bounds = array<i64: 1>, scalar_prefetch = 0 : i64, scratch_operands = 0 : i64, tpu.core_type = #tpu.core_type<tc>, window_params = [{transform_indices = @transform_0, window_bounds = array<i64: 8, 128>}, {transform_indices = @transform_1, window_bounds = array<i64: 8, 128>}, {pipeline_mode = #tpu.pipeline_mode<synchronous>, transform_indices = @transform_2, window_bounds = array<i64: 8, 8>}, {pipeline_mode = #tpu.pipeline_mode<synchronous>, transform_indices = @transform_3, window_bounds = array<i64: 8, 1>}, {pipeline_mode = #tpu.pipeline_mode<synchronous>, transform_indices = @transform_4, window_bounds = array<i64: 8, 1>}, {pipeline_mode = #tpu.pipeline_mode<synchronous>, transform_indices = @transform_5, window_bounds = array<i64: 8, 1>}, {transform_indices = @transform_6, window_bounds = array<i64: 8, 128>}]} {
    %c0 = arith.constant 0 : index
    %c0_0 = arith.constant 0 : index
    %0 = vector.load %arg3[%c0, %c0_0] : memref<8x8xf32, #tpu.memory_space<vmem>>, vector<8x8xf32>
    %c0_1 = arith.constant 0 : index
    %c0_2 = arith.constant 0 : index
    %1 = vector.load %arg2[%c0_1, %c0_2] : memref<8x128xf32, #tpu.memory_space<vmem>>, vector<8x128xf32>
    %cst = arith.constant dense<0.000000e+00> : vector<8x128xf32>
    %2 = tpu.matmul %0, %1, %cst {dimension_numbers = #tpu.dot_dimension_numbers<[1], [0], [0], [1], [0, 0, 1, 1], [], []>} : vector<8x8xf32>, vector<8x128xf32>, vector<8x128xf32> -> vector<8x128xf32>
    %c0_3 = arith.constant 0 : index
    %c0_4 = arith.constant 0 : index
    %3 = vector.load %arg4[%c0_3, %c0_4] : memref<8x1xf32, #tpu.memory_space<vmem>>, vector<8x1xf32>
    %4 = vector.broadcast %3 : vector<8x1xf32> to vector<8x128xf32>
    %5 = arith.addf %2, %4 : vector<8x128xf32>
    %c0_5 = arith.constant 0 : index
    %c0_6 = arith.constant 0 : index
    %6 = vector.load %arg1[%c0_5, %c0_6] : memref<8x128xf32, #tpu.memory_space<vmem>>, vector<8x128xf32>
    %c0_7 = arith.constant 0 : index
    %c0_8 = arith.constant 0 : index
    %7 = vector.load %arg5[%c0_7, %c0_8] : memref<8x1xf32, #tpu.memory_space<vmem>>, vector<8x1xf32>
    %8 = vector.broadcast %7 : vector<8x1xf32> to vector<8x128xf32>
    %9 = arith.mulf %6, %8 : vector<8x128xf32>
    %c0_9 = arith.constant 0 : index
    %c0_10 = arith.constant 0 : index
    %10 = vector.load %arg6[%c0_9, %c0_10] : memref<8x1xf32, #tpu.memory_space<vmem>>, vector<8x1xf32>
    %11 = vector.broadcast %10 : vector<8x1xf32> to vector<8x128xf32>
    %12 = arith.addf %9, %11 : vector<8x128xf32>
    %13 = arith.addf %12, %5 : vector<8x128xf32>
    %cst_11 = arith.constant 0.000000e+00 : f32
    %14 = vector.broadcast %cst_11 : f32 to vector<8x128xf32>
    %15 = arith.maximumf %13, %14 : vector<8x128xf32>
    %c0_12 = arith.constant 0 : index
    %c0_13 = arith.constant 0 : index
    %16 = vector.load %arg7[%c0_12, %c0_13] : memref<8x128xf32, #tpu.memory_space<vmem>>, vector<8x128xf32>
    tpu.vector_store %arg7[%c0_12, %c0_13], %15 {strides = array<i32>} : memref<8x128xf32, #tpu.memory_space<vmem>>, vector<8x128xf32>,
    return
  }
  func.func @transform_0(%arg0: i32) -> (i32, i32) {
    %c0_i32 = arith.constant 0 : i32
    %c0_i32_0 = arith.constant 0 : i32
    return %c0_i32, %arg0 : i32, i32
  }
  func.func @transform_1(%arg0: i32) -> (i32, i32) {
    %c0_i32 = arith.constant 0 : i32
    %c0_i32_0 = arith.constant 0 : i32
    return %c0_i32, %arg0 : i32, i32
  }
  func.func @transform_2(%arg0: i32) -> (i32, i32) {
    %c0_i32 = arith.constant 0 : i32
    %c0_i32_0 = arith.constant 0 : i32
    %c0_i32_1 = arith.constant 0 : i32
    return %c0_i32, %c0_i32_0 : i32, i32
  }
  func.func @transform_3(%arg0: i32) -> (i32, i32) {
    %c0_i32 = arith.constant 0 : i32
    %c0_i32_0 = arith.constant 0 : i32
    %c0_i32_1 = arith.constant 0 : i32
    return %c0_i32, %c0_i32_0 : i32, i32
  }
  func.func @transform_4(%arg0: i32) -> (i32, i32) {
    %c0_i32 = arith.constant 0 : i32
    %c0_i32_0 = arith.constant 0 : i32
    %c0_i32_1 = arith.constant 0 : i32
    return %c0_i32, %c0_i32_0 : i32, i32
  }
  func.func @transform_5(%arg0: i32) -> (i32, i32) {
    %c0_i32 = arith.constant 0 : i32
    %c0_i32_0 = arith.constant 0 : i32
    %c0_i32_1 = arith.constant 0 : i32
    return %c0_i32, %c0_i32_0 : i32, i32
  }
  func.func @transform_6(%arg0: i32) -> (i32, i32) {
    %c0_i32 = arith.constant 0 : i32
    %c0_i32_0 = arith.constant 0 : i32
    return %c0_i32, %arg0 : i32, i32
  }
}

module attributes {stable_mosaic.version = 11 : i64} {
  func.func @_conv_stats_kernel(%arg0: i32, %arg1: i32, %arg2: memref<72x128xf32, #tpu.memory_space<vmem>>, %arg3: memref<8x72xf32, #tpu.memory_space<vmem>>, %arg4: memref<8x128xf32, #tpu.memory_space<vmem>>, %arg5: memref<1x8x1xf32, #tpu.memory_space<vmem>>, %arg6: memref<1x8x1xf32, #tpu.memory_space<vmem>>) attributes {dimension_semantics = [#tpu.dimension_semantics<parallel>, #tpu.dimension_semantics<arbitrary>], iteration_bounds = array<i64: 1, 1>, scalar_prefetch = 0 : i64, scratch_operands = 0 : i64, tpu.core_type = #tpu.core_type<tc>, window_params = [{transform_indices = @transform_0, window_bounds = array<i64: 72, 128>}, {pipeline_mode = #tpu.pipeline_mode<synchronous>, transform_indices = @transform_1, window_bounds = array<i64: 8, 72>}, {transform_indices = @transform_2, window_bounds = array<i64: 8, 128>}, {transform_indices = @transform_3, window_bounds = array<i64: 1, 8, 1>}, {transform_indices = @transform_4, window_bounds = array<i64: 1, 8, 1>}]} {
    %c0 = arith.constant 0 : index
    %c0_0 = arith.constant 0 : index
    %0 = vector.load %arg3[%c0, %c0_0] : memref<8x72xf32, #tpu.memory_space<vmem>>, vector<8x72xf32>
    %c0_1 = arith.constant 0 : index
    %c0_2 = arith.constant 0 : index
    %1 = vector.load %arg2[%c0_1, %c0_2] : memref<72x128xf32, #tpu.memory_space<vmem>>, vector<72x128xf32>
    %cst = arith.constant dense<0.000000e+00> : vector<8x128xf32>
    %2 = tpu.matmul %0, %1, %cst {dimension_numbers = #tpu.dot_dimension_numbers<[1], [0], [0], [1], [0, 0, 1, 1], [], []>} : vector<8x72xf32>, vector<72x128xf32>, vector<8x128xf32> -> vector<8x128xf32>
    %c0_3 = arith.constant 0 : index
    %c0_4 = arith.constant 0 : index
    %3 = vector.load %arg4[%c0_3, %c0_4] : memref<8x128xf32, #tpu.memory_space<vmem>>, vector<8x128xf32>
    tpu.vector_store %arg4[%c0_3, %c0_4], %2 {strides = array<i32>} : memref<8x128xf32, #tpu.memory_space<vmem>>, vector<8x128xf32>,
    %c0_i32 = arith.constant 0 : i32
    %4 = arith.cmpi eq, %arg1, %c0_i32 : i32
    %5 = arith.extui %4 : i1 to i32
    %c0_i32_5 = arith.constant 0 : i32
    %6 = arith.cmpi ne, %5, %c0_i32_5 : i32
    scf.if %6 {
      %cst_20 = arith.constant 0.000000e+00 : f32
      %20 = vector.broadcast %cst_20 : f32 to vector<1x8x1xf32>
      %c0_21 = arith.constant 0 : index
      %c0_22 = arith.constant 0 : index
      %c0_23 = arith.constant 0 : index
      %21 = vector.load %arg5[%c0_21, %c0_22, %c0_23] : memref<1x8x1xf32, #tpu.memory_space<vmem>>, vector<1x8x1xf32>
      tpu.vector_store %arg5[%c0_21, %c0_22, %c0_23], %20 {strides = array<i32>} : memref<1x8x1xf32, #tpu.memory_space<vmem>>, vector<1x8x1xf32>,
      %cst_24 = arith.constant 0.000000e+00 : f32
      %22 = vector.broadcast %cst_24 : f32 to vector<1x8x1xf32>
      %c0_25 = arith.constant 0 : index
      %c0_26 = arith.constant 0 : index
      %c0_27 = arith.constant 0 : index
      %23 = vector.load %arg6[%c0_25, %c0_26, %c0_27] : memref<1x8x1xf32, #tpu.memory_space<vmem>>, vector<1x8x1xf32>
      tpu.vector_store %arg6[%c0_25, %c0_26, %c0_27], %22 {strides = array<i32>} : memref<1x8x1xf32, #tpu.memory_space<vmem>>, vector<1x8x1xf32>,
    } else {
    }
    %cst_6 = arith.constant dense<0.000000e+00> : vector<8xf32>
    %7 = vector.multi_reduction <add>, %2, %cst_6 [1] : vector<8x128xf32> to vector<8xf32>
    %8 = vector.shape_cast %7 : vector<8xf32> to vector<8x1xf32>
    %9 = arith.mulf %2, %2 : vector<8x128xf32>
    %cst_7 = arith.constant dense<0.000000e+00> : vector<8xf32>
    %10 = vector.multi_reduction <add>, %9, %cst_7 [1] : vector<8x128xf32> to vector<8xf32>
    %11 = vector.shape_cast %10 : vector<8xf32> to vector<8x1xf32>
    %c0_8 = arith.constant 0 : index
    %c0_9 = arith.constant 0 : index
    %c0_10 = arith.constant 0 : index
    %12 = vector.load %arg5[%c0_8, %c0_9, %c0_10] : memref<1x8x1xf32, #tpu.memory_space<vmem>>, vector<1x8x1xf32>
    %13 = vector.shape_cast %8 : vector<8x1xf32> to vector<1x8x1xf32>
    %14 = arith.addf %12, %13 : vector<1x8x1xf32>
    %c0_11 = arith.constant 0 : index
    %c0_12 = arith.constant 0 : index
    %c0_13 = arith.constant 0 : index
    %15 = vector.load %arg5[%c0_11, %c0_12, %c0_13] : memref<1x8x1xf32, #tpu.memory_space<vmem>>, vector<1x8x1xf32>
    tpu.vector_store %arg5[%c0_11, %c0_12, %c0_13], %14 {strides = array<i32>} : memref<1x8x1xf32, #tpu.memory_space<vmem>>, vector<1x8x1xf32>,
    %c0_14 = arith.constant 0 : index
    %c0_15 = arith.constant 0 : index
    %c0_16 = arith.constant 0 : index
    %16 = vector.load %arg6[%c0_14, %c0_15, %c0_16] : memref<1x8x1xf32, #tpu.memory_space<vmem>>, vector<1x8x1xf32>
    %17 = vector.shape_cast %11 : vector<8x1xf32> to vector<1x8x1xf32>
    %18 = arith.addf %16, %17 : vector<1x8x1xf32>
    %c0_17 = arith.constant 0 : index
    %c0_18 = arith.constant 0 : index
    %c0_19 = arith.constant 0 : index
    %19 = vector.load %arg6[%c0_17, %c0_18, %c0_19] : memref<1x8x1xf32, #tpu.memory_space<vmem>>, vector<1x8x1xf32>
    tpu.vector_store %arg6[%c0_17, %c0_18, %c0_19], %18 {strides = array<i32>} : memref<1x8x1xf32, #tpu.memory_space<vmem>>, vector<1x8x1xf32>,
    return
  }
  func.func @transform_0(%arg0: i32, %arg1: i32) -> (i32, i32) {
    %c1_i32 = arith.constant 1 : i32
    %0 = arith.muli %arg0, %c1_i32 : i32
    %1 = arith.addi %0, %arg1 : i32
    %c0_i32 = arith.constant 0 : i32
    %c0_i32_0 = arith.constant 0 : i32
    return %c0_i32, %1 : i32, i32
  }
  func.func @transform_1(%arg0: i32, %arg1: i32) -> (i32, i32) {
    %c0_i32 = arith.constant 0 : i32
    %c0_i32_0 = arith.constant 0 : i32
    %c0_i32_1 = arith.constant 0 : i32
    return %c0_i32, %c0_i32_0 : i32, i32
  }
  func.func @transform_2(%arg0: i32, %arg1: i32) -> (i32, i32) {
    %c1_i32 = arith.constant 1 : i32
    %0 = arith.muli %arg0, %c1_i32 : i32
    %1 = arith.addi %0, %arg1 : i32
    %c0_i32 = arith.constant 0 : i32
    %c0_i32_0 = arith.constant 0 : i32
    return %c0_i32, %1 : i32, i32
  }
  func.func @transform_3(%arg0: i32, %arg1: i32) -> (i32, i32, i32) {
    %c0_i32 = arith.constant 0 : i32
    %c0_i32_0 = arith.constant 0 : i32
    %c0_i32_1 = arith.constant 0 : i32
    return %arg0, %c0_i32, %c0_i32_0 : i32, i32, i32
  }
  func.func @transform_4(%arg0: i32, %arg1: i32) -> (i32, i32, i32) {
    %c0_i32 = arith.constant 0 : i32
    %c0_i32_0 = arith.constant 0 : i32
    %c0_i32_1 = arith.constant 0 : i32
    return %arg0, %c0_i32, %c0_i32_0 : i32, i32, i32
  }
}

</mosaic_0001>

<llo_original>
// kernel: res_convdown_forward.4
$region0: #{res_convdown_forward.4}
  #allocation0 [shape = 'u32[]', space=smem, size = 0x4, offset = 0x4, fixed_abs, tag = 'smem constant byte address 0x4 - core index']
  #allocation1 [shape = 'u32[72,128]{1,0:T(1,128)}', space=vmem, size = 0x9000, scoped, tag = 'internal scratch']
  %s0 = inlined_call_operand.vmem [shape: f32[40,128], index: 0, kind: input, shape index: {}]
  %s1 = inlined_call_operand.vmem [shape: f32[8,40], index: 1, kind: input, shape index: {}]
  %s2 = inlined_call_operand.vmem [shape: f32[8,128], index: 2, kind: output, shape index: {0}]
  %s3 = inlined_call_operand.vmem [shape: f32[1,8,1], index: 3, kind: output, shape index: {1}]
  %s4 = inlined_call_operand.vmem [shape: f32[1,8,1], index: 4, kind: output, shape index: {2}]
  %5 = xla_tuple %s2, %s3, %s4
  %s6 = sld [smem:[#allocation0]]
  $region38: #{res_convdown_forward.4} parent=0
    _
  %s8 = ssub.s32 1, %s6
  %s9 = scalar_select 0, %s8, %s6
  // Predicated region
  $region2: #{res_convdown_forward.4} parent=0 // pred_check
    _
  $region3: #{res_convdown_forward.4} parent=0 // pred_check_branch
    %11 = sbr.rel (0) target = $region5
  $region4: #{res_convdown_forward.4} parent=0 // pred_region
    %s12 = sadd.s32 0, 0
    %p13 = scmp.lt.s32.totalorder %s12, 0
    %s14 = scalar_select %p13, %s12, 0
    %s15 = smul.addr %s14, 8
    %s16 = scalar_lea.vmem %s0, %s15
    %s17 = sadd.s32 0, 0
  $region5: #{res_convdown_forward.4} parent=0 // pred_fallthru
    _
  // Predicated region
  $region6: #{res_convdown_forward.4} parent=0 // pred_check
    _
  $region7: #{res_convdown_forward.4} parent=0 // pred_check_branch
    %19 = sbr.rel (0) target = $region9
  $region8: #{res_convdown_forward.4} parent=0 // pred_region
    _
  $region9: #{res_convdown_forward.4} parent=0 // pred_fallthru
    _
  %s20 = sadd.s32 0, 0
  %p21 = scmp.lt.s32.totalorder %s20, 0
  %s22 = scalar_select %p21, %s20, 0
  %s23 = smul.addr %s22, 8
  %s24 = scalar_lea.vmem %s0, %s23
  %s25 = sadd.s32 0, 0
  %p26 = scmp.lt.s32.totalorder %s25, 0
  %s27 = scalar_select %p26, %s25, 0
  %s28 = smul.addr %s27, 8
  %s29 = scalar_lea.vmem %s2, %s28
  %s30 = sadd.s32 0, 0
  %p31 = scmp.lt.s32.totalorder %s30, 0
  %s32 = scalar_select %p31, %s30, 0
  %s33 = smul.addr %s32, 8
  %s34 = scalar_lea.vmem %s0, %s33
  %s35 = sadd.s32 0, 0
  %s36 = sadd.s32 0, 0
  %p37 = scmp.lt.s32.totalorder %s36, 0
  %s38 = scalar_select %p37, %s36, 0
  %s39 = smul.addr %s38, 8
  %s40 = scalar_lea.vmem %s2, %s39
  %s41 = sadd.s32 0, 0
  %v42 = vld [vmem:[%s1] sm:$0xff]
  %v43 = vld [vmem:[%s34] sm:$0xff]
  %v44 = vld [vmem:[%s34 + $0x8] sm:$0xff]
  %v45 = vld [vmem:[%s34 + $0x10] sm:$0xff]
  %v46 = vld [vmem:[%s34 + $0x18] sm:$0xff]
  %v47 = vld [vmem:[%s34 + $0x20] sm:$0xff]
  %vm48 = vcmask 326656
  %v50 = vsel %vm48, %v42, 0
  %52 = vmatpush.msra.mxu0 0.0
  %53 = vmatpush.msra.mxu0 0.0
  %54 = vmatpush.msra.mxu0 0.0
  %55 = vmatpush.msra.mxu0 0.0
  %56 = vmatpush.msra.mxu0 0.0
  %57 = vmatpush.msra.mxu0 0.0
  %58 = vmatpush.msra.mxu0 0.0
  %59 = vmatpush.msra.mxu0 0.0
  %60 = vmatpush.msra.mxu0 0.0
  %61 = vmatpush.msra.mxu0 0.0
  %62 = vmatpush.msra.mxu0 0.0
  %63 = vmatpush.msra.mxu0 %v47
  %64 = vmatpush.msra.mxu0 %v46
  %65 = vmatpush.msra.mxu0 %v45
  %66 = vmatpush.msra.mxu0 %v44
  %67 = vmatpush.msra.mxu0 %v43
  %68 = vmatmul.f32.gmra.mxu0 %v50
  %v69 = vpop.f32.mrf.mxu0
  %v70 = vadd.f32 0.0, %v69
  %71 = vdwg.mxu0
  %72 = vst [vmem:[%s40] sm:$0xff] %v70
  %p73 = scmp.eq.s32.totalorder 0, 0
  // Predicated region
  $region10: #{res_convdown_forward.4} parent=0 // pred_check
    %p74 = pneg %p73
  $region11: #{res_convdown_forward.4} parent=0 // pred_check_branch
    %76 = sbr.rel (%p74) target = $region13
  $region12: #{res_convdown_forward.4} parent=0 // pred_region
    %vm77 = vcmask 7168
    %78 = vst.msk [vmem:[%s3] sm:$0xff] %vm77, 0.0
    %79 = vst.msk [vmem:[%s4] sm:$0xff] %vm77, 0.0
  $region13: #{res_convdown_forward.4} parent=0 // pred_fallthru
    _
  %80 = vadd.xlane.f32.xlu0 %v70
  %v81 = vpop.xlane.xlu0 %80
  %v82 = vmul.f32 %v70, %v70
  %83 = vadd.xlane.f32.xlu0 %v82
  %v84 = vpop.xlane.xlu0 %83
  %v85 = vld [vmem:[%s3] sm:$0xff]
  %v86 = vadd.f32 %v85, %v81
  %vm87 = vcmask 7168
  %88 = vst.msk [vmem:[%s3] sm:$0xff] %vm87, %v86
  %v89 = vld [vmem:[%s4] sm:$0xff]
  %v90 = vadd.f32 %v89, %v84
  %91 = vst.msk [vmem:[%s4] sm:$0xff] %vm87, %v90
  %s92 = sadd.s32 0, 0
  %p93 = scmp.lt.s32.totalorder %s92, 0
  %s94 = scalar_select %p93, %s92, 0
  %s95 = smul.addr %s94, 8
  %s96 = scalar_lea.vmem %s2, %s95
  // Predicated region
  $region14: #{res_convdown_forward.4} parent=0 // pred_check
    _
  $region15: #{res_convdown_forward.4} parent=0 // pred_check_branch
    %98 = sbr.rel (0) target = $region17
  $region16: #{res_convdown_forward.4} parent=0 // pred_region
    %s99 = sadd.s32 0, 0
  $region17: #{res_convdown_forward.4} parent=0 // pred_fallthru
    _
  // Predicated region
  $region18: #{res_convdown_forward.4} parent=0 // pred_check
    _
  $region19: #{res_convdown_forward.4} parent=0 // pred_check_branch
    %101 = sbr.rel (0) target = $region21
  $region20: #{res_convdown_forward.4} parent=0 // pred_region
    _
  $region21: #{res_convdown_forward.4} parent=0 // pred_fallthru
    _
  // Predicated region
  $region22: #{res_convdown_forward.4} parent=0 // pred_check
    _
  $region23: #{res_convdown_forward.4} parent=0 // pred_check_branch
    %103 = sbr.rel (0) target = $region25
  $region24: #{res_convdown_forward.4} parent=0 // pred_region
    _
  $region25: #{res_convdown_forward.4} parent=0 // pred_fallthru
    _
  // Predicated region
  $region26: #{res_convdown_forward.4} parent=0 // pred_check
    _
  $region27: #{res_convdown_forward.4} parent=0 // pred_check_branch
    %105 = sbr.rel (0) target = $region29
  $region28: #{res_convdown_forward.4} parent=0 // pred_region
    %s106 = sadd.s32 0, 0
    %p107 = scmp.lt.s32.totalorder %s106, 0
    %s108 = scalar_select %p107, %s106, 0
    %s109 = smul.addr %s108, 8
    %s110 = scalar_lea.vmem %s2, %s109
  $region29: #{res_convdown_forward.4} parent=0 // pred_fallthru
    _
  // Predicated region
  $region30: #{res_convdown_forward.4} parent=0 // pred_check
    _
  $region31: #{res_convdown_forward.4} parent=0 // pred_check_branch
    %112 = sbr.rel (0) target = $region33
  $region32: #{res_convdown_forward.4} parent=0 // pred_region
    _
  $region33: #{res_convdown_forward.4} parent=0 // pred_fallthru
    _
  // Predicated region
  $region34: #{res_convdown_forward.4} parent=0 // pred_check
    _
  $region35: #{res_convdown_forward.4} parent=0 // pred_check_branch
    %114 = sbr.rel (0) target = $region37
  $region36: #{res_convdown_forward.4} parent=0 // pred_region
    _
  $region37: #{res_convdown_forward.4} parent=0 // pred_fallthru
    _

// kernel: res_convdown_forward.5
$region0: #{res_convdown_forward.5}
  #allocation0 [shape = 'u32[]', space=smem, size = 0x4, offset = 0x4, fixed_abs, tag = 'smem constant byte address 0x4 - core index']
  #allocation1 [shape = 'u32[72,128]{1,0:T(1,128)}', space=vmem, size = 0x9000, scoped, tag = 'internal scratch']
  %s0 = inlined_call_operand.vmem [shape: f32[8,128], index: 0, kind: input, shape index: {}]
  %s1 = inlined_call_operand.vmem [shape: f32[8,1], index: 1, kind: input, shape index: {}]
  %s2 = inlined_call_operand.vmem [shape: f32[8,1], index: 2, kind: input, shape index: {}]
  %s3 = inlined_call_operand.vmem [shape: f32[8,128], index: 3, kind: output, shape index: {}]
  %s4 = sld [smem:[#allocation0]]
  $region22: #{res_convdown_forward.5} parent=0
    _
  %s6 = ssub.s32 1, %s4
  %s7 = scalar_select 0, %s6, %s4
  // Predicated region
  $region2: #{res_convdown_forward.5} parent=0 // pred_check
    _
  $region3: #{res_convdown_forward.5} parent=0 // pred_check_branch
    %9 = sbr.rel (0) target = $region5
  $region4: #{res_convdown_forward.5} parent=0 // pred_region
    _
  $region5: #{res_convdown_forward.5} parent=0 // pred_fallthru
    _
  // Predicated region
  $region6: #{res_convdown_forward.5} parent=0 // pred_check
    _
  $region7: #{res_convdown_forward.5} parent=0 // pred_check_branch
    %11 = sbr.rel (0) target = $region9
  $region8: #{res_convdown_forward.5} parent=0 // pred_region
    _
  $region9: #{res_convdown_forward.5} parent=0 // pred_fallthru
    _
  // Predicated region
  $region10: #{res_convdown_forward.5} parent=0 // pred_check
    _
  $region11: #{res_convdown_forward.5} parent=0 // pred_check_branch
    %13 = sbr.rel (0) target = $region13
  $region12: #{res_convdown_forward.5} parent=0 // pred_region
    _
  $region13: #{res_convdown_forward.5} parent=0 // pred_fallthru
    _
  %v14 = vld [vmem:[%s0] sm:$0xff]
  %v15 = vld [vmem:[%s1] sm:$0xff]
  %17 = vset.pattern.permute.xlu0 0
  %18 = vperm.xlu0 %17, %v15
  %v19 = vpop.permute.xlu0 %18
  %v21 = vmul.f32 %v14, %v19
  %v22 = vld [vmem:[%s2] sm:$0xff]
  %24 = vset.pattern.permute.xlu0 0
  %25 = vperm.xlu0 %24, %v22
  %v26 = vpop.permute.xlu0 %25
  %v28 = vadd.f32 %v21, %v26
  %v29 = vmax.f32 %v28, 0.0
  %30 = vst [vmem:[%s3] sm:$0xff] %v29
  // Predicated region
  $region14: #{res_convdown_forward.5} parent=0 // pred_check
    _
  $region15: #{res_convdown_forward.5} parent=0 // pred_check_branch
    %32 = sbr.rel (0) target = $region17
  $region16: #{res_convdown_forward.5} parent=0 // pred_region
    _
  $region17: #{res_convdown_forward.5} parent=0 // pred_fallthru
    _
  // Predicated region
  $region18: #{res_convdown_forward.5} parent=0 // pred_check
    _
  $region19: #{res_convdown_forward.5} parent=0 // pred_check_branch
    %34 = sbr.rel (0) target = $region21
  $region20: #{res_convdown_forward.5} parent=0 // pred_region
    _
  $region21: #{res_convdown_forward.5} parent=0 // pred_fallthru
    _

// kernel: res_convdown_forward.6
$region0: #{res_convdown_forward.6}
  #allocation0 [shape = 'u32[]', space=smem, size = 0x4, offset = 0x4, fixed_abs, tag = 'smem constant byte address 0x4 - core index']
  #allocation1 [shape = 'u32[72,128]{1,0:T(1,128)}', space=vmem, size = 0x9000, scoped, tag = 'internal scratch']
  %s0 = inlined_call_operand.vmem [shape: f32[72,128], index: 0, kind: input, shape index: {}]
  %s1 = inlined_call_operand.vmem [shape: f32[8,72], index: 1, kind: input, shape index: {}]
  %s2 = inlined_call_operand.vmem [shape: f32[8,128], index: 2, kind: output, shape index: {0}]
  %s3 = inlined_call_operand.vmem [shape: f32[1,8,1], index: 3, kind: output, shape index: {1}]
  %s4 = inlined_call_operand.vmem [shape: f32[1,8,1], index: 4, kind: output, shape index: {2}]
  %5 = xla_tuple %s2, %s3, %s4
  %s6 = sld [smem:[#allocation0]]
  $region38: #{res_convdown_forward.6} parent=0
    _
  %s8 = ssub.s32 1, %s6
  %s9 = scalar_select 0, %s8, %s6
  // Predicated region
  $region2: #{res_convdown_forward.6} parent=0 // pred_check
    _
  $region3: #{res_convdown_forward.6} parent=0 // pred_check_branch
    %11 = sbr.rel (0) target = $region5
  $region4: #{res_convdown_forward.6} parent=0 // pred_region
    %s12 = sadd.s32 0, 0
    %p13 = scmp.lt.s32.totalorder %s12, 0
    %s14 = scalar_select %p13, %s12, 0
    %s15 = smul.addr %s14, 8
    %s16 = scalar_lea.vmem %s0, %s15
    %s17 = sadd.s32 0, 0
  $region5: #{res_convdown_forward.6} parent=0 // pred_fallthru
    _
  // Predicated region
  $region6: #{res_convdown_forward.6} parent=0 // pred_check
    _
  $region7: #{res_convdown_forward.6} parent=0 // pred_check_branch
    %19 = sbr.rel (0) target = $region9
  $region8: #{res_convdown_forward.6} parent=0 // pred_region
    _
  $region9: #{res_convdown_forward.6} parent=0 // pred_fallthru
    _
  %s20 = sadd.s32 0, 0
  %p21 = scmp.lt.s32.totalorder %s20, 0
  %s22 = scalar_select %p21, %s20, 0
  %s23 = smul.addr %s22, 8
  %s24 = scalar_lea.vmem %s0, %s23
  %s25 = sadd.s32 0, 0
  %p26 = scmp.lt.s32.totalorder %s25, 0
  %s27 = scalar_select %p26, %s25, 0
  %s28 = smul.addr %s27, 8
  %s29 = scalar_lea.vmem %s2, %s28
  %s30 = sadd.s32 0, 0
  %p31 = scmp.lt.s32.totalorder %s30, 0
  %s32 = scalar_select %p31, %s30, 0
  %s33 = smul.addr %s32, 8
  %s34 = scalar_lea.vmem %s0, %s33
  %s35 = sadd.s32 0, 0
  %s36 = sadd.s32 0, 0
  %p37 = scmp.lt.s32.totalorder %s36, 0
  %s38 = scalar_select %p37, %s36, 0
  %s39 = smul.addr %s38, 8
  %s40 = scalar_lea.vmem %s2, %s39
  %s41 = sadd.s32 0, 0
  %v42 = vld [vmem:[%s1] sm:$0xff]
  %v43 = vld [vmem:[%s34] sm:$0xff]
  %v44 = vld [vmem:[%s34 + $0x8] sm:$0xff]
  %v45 = vld [vmem:[%s34 + $0x10] sm:$0xff]
  %v46 = vld [vmem:[%s34 + $0x18] sm:$0xff]
  %v47 = vld [vmem:[%s34 + $0x20] sm:$0xff]
  %v48 = vld [vmem:[%s34 + $0x28] sm:$0xff]
  %v49 = vld [vmem:[%s34 + $0x30] sm:$0xff]
  %v50 = vld [vmem:[%s34 + $0x38] sm:$0xff]
  %v51 = vld [vmem:[%s34 + $0x40] sm:$0xff]
  %vm52 = vcmask 588800
  %v54 = vsel %vm52, %v42, 0
  %56 = vmatpush.msra.mxu0 0.0
  %57 = vmatpush.msra.mxu0 0.0
  %58 = vmatpush.msra.mxu0 0.0
  %59 = vmatpush.msra.mxu0 0.0
  %60 = vmatpush.msra.mxu0 0.0
  %61 = vmatpush.msra.mxu0 0.0
  %62 = vmatpush.msra.mxu0 0.0
  %63 = vmatpush.msra.mxu0 %v51
  %64 = vmatpush.msra.mxu0 %v50
  %65 = vmatpush.msra.mxu0 %v49
  %66 = vmatpush.msra.mxu0 %v48
  %67 = vmatpush.msra.mxu0 %v47
  %68 = vmatpush.msra.mxu0 %v46
  %69 = vmatpush.msra.mxu0 %v45
  %70 = vmatpush.msra.mxu0 %v44
  %71 = vmatpush.msra.mxu0 %v43
  %72 = vmatmul.f32.gmra.mxu0 %v54
  %v73 = vpop.f32.mrf.mxu0
  %v74 = vadd.f32 0.0, %v73
  %75 = vdwg.mxu0
  %76 = vst [vmem:[%s40] sm:$0xff] %v74
  %p77 = scmp.eq.s32.totalorder 0, 0
  // Predicated region
  $region10: #{res_convdown_forward.6} parent=0 // pred_check
    %p78 = pneg %p77
  $region11: #{res_convdown_forward.6} parent=0 // pred_check_branch
    %80 = sbr.rel (%p78) target = $region13
  $region12: #{res_convdown_forward.6} parent=0 // pred_region
    %vm81 = vcmask 7168
    %82 = vst.msk [vmem:[%s3] sm:$0xff] %vm81, 0.0
    %83 = vst.msk [vmem:[%s4] sm:$0xff] %vm81, 0.0
  $region13: #{res_convdown_forward.6} parent=0 // pred_fallthru
    _
  %84 = vadd.xlane.f32.xlu0 %v74
  %v85 = vpop.xlane.xlu0 %84
  %v86 = vmul.f32 %v74, %v74
  %87 = vadd.xlane.f32.xlu0 %v86
  %v88 = vpop.xlane.xlu0 %87
  %v89 = vld [vmem:[%s3] sm:$0xff]
  %v90 = vadd.f32 %v89, %v85
  %vm91 = vcmask 7168
  %92 = vst.msk [vmem:[%s3] sm:$0xff] %vm91, %v90
  %v93 = vld [vmem:[%s4] sm:$0xff]
  %v94 = vadd.f32 %v93, %v88
  %95 = vst.msk [vmem:[%s4] sm:$0xff] %vm91, %v94
  %s96 = sadd.s32 0, 0
  %p97 = scmp.lt.s32.totalorder %s96, 0
  %s98 = scalar_select %p97, %s96, 0
  %s99 = smul.addr %s98, 8
  %s100 = scalar_lea.vmem %s2, %s99
  // Predicated region
  $region14: #{res_convdown_forward.6} parent=0 // pred_check
    _
  $region15: #{res_convdown_forward.6} parent=0 // pred_check_branch
    %102 = sbr.rel (0) target = $region17
  $region16: #{res_convdown_forward.6} parent=0 // pred_region
    %s103 = sadd.s32 0, 0
  $region17: #{res_convdown_forward.6} parent=0 // pred_fallthru
    _
  // Predicated region
  $region18: #{res_convdown_forward.6} parent=0 // pred_check
    _
  $region19: #{res_convdown_forward.6} parent=0 // pred_check_branch
    %105 = sbr.rel (0) target = $region21
  $region20: #{res_convdown_forward.6} parent=0 // pred_region
    _
  $region21: #{res_convdown_forward.6} parent=0 // pred_fallthru
    _
  // Predicated region
  $region22: #{res_convdown_forward.6} parent=0 // pred_check
    _
  $region23: #{res_convdown_forward.6} parent=0 // pred_check_branch
    %107 = sbr.rel (0) target = $region25
  $region24: #{res_convdown_forward.6} parent=0 // pred_region
    _
  $region25: #{res_convdown_forward.6} parent=0 // pred_fallthru
    _
  // Predicated region
  $region26: #{res_convdown_forward.6} parent=0 // pred_check
    _
  $region27: #{res_convdown_forward.6} parent=0 // pred_check_branch
    %109 = sbr.rel (0) target = $region29
  $region28: #{res_convdown_forward.6} parent=0 // pred_region
    %s110 = sadd.s32 0, 0
    %p111 = scmp.lt.s32.totalorder %s110, 0
    %s112 = scalar_select %p111, %s110, 0
    %s113 = smul.addr %s112, 8
    %s114 = scalar_lea.vmem %s2, %s113
  $region29: #{res_convdown_forward.6} parent=0 // pred_fallthru
    _
  // Predicated region
  $region30: #{res_convdown_forward.6} parent=0 // pred_check
    _
  $region31: #{res_convdown_forward.6} parent=0 // pred_check_branch
    %116 = sbr.rel (0) target = $region33
  $region32: #{res_convdown_forward.6} parent=0 // pred_region
    _
  $region33: #{res_convdown_forward.6} parent=0 // pred_fallthru
    _
  // Predicated region
  $region34: #{res_convdown_forward.6} parent=0 // pred_check
    _
  $region35: #{res_convdown_forward.6} parent=0 // pred_check_branch
    %118 = sbr.rel (0) target = $region37
  $region36: #{res_convdown_forward.6} parent=0 // pred_region
    _
  $region37: #{res_convdown_forward.6} parent=0 // pred_fallthru
    _

// kernel: res_convdown_forward.7
$region0: #{res_convdown_forward.7}
  #allocation0 [shape = 'u32[]', space=smem, size = 0x4, offset = 0x4, fixed_abs, tag = 'smem constant byte address 0x4 - core index']
  #allocation1 [shape = 'u32[72,128]{1,0:T(1,128)}', space=vmem, size = 0x9000, scoped, tag = 'internal scratch']
  %s0 = inlined_call_operand.vmem [shape: f32[8,128], index: 0, kind: input, shape index: {}]
  %s1 = inlined_call_operand.vmem [shape: f32[8,128], index: 1, kind: input, shape index: {}]
  %s2 = inlined_call_operand.vmem [shape: f32[8,8], index: 2, kind: input, shape index: {}]
  %s3 = inlined_call_operand.vmem [shape: f32[8,1], index: 3, kind: input, shape index: {}]
  %s4 = inlined_call_operand.vmem [shape: f32[8,1], index: 4, kind: input, shape index: {}]
  %s5 = inlined_call_operand.vmem [shape: f32[8,1], index: 5, kind: input, shape index: {}]
  %s6 = inlined_call_operand.vmem [shape: f32[8,128], index: 6, kind: output, shape index: {}]
  %s7 = sld [smem:[#allocation0]]
  $region34: #{res_convdown_forward.7} parent=0
    _
  %s9 = ssub.s32 1, %s7
  %s10 = scalar_select 0, %s9, %s7
  // Predicated region
  $region2: #{res_convdown_forward.7} parent=0 // pred_check
    _
  $region3: #{res_convdown_forward.7} parent=0 // pred_check_branch
    %12 = sbr.rel (0) target = $region5
  $region4: #{res_convdown_forward.7} parent=0 // pred_region
    _
  $region5: #{res_convdown_forward.7} parent=0 // pred_fallthru
    _
  // Predicated region
  $region6: #{res_convdown_forward.7} parent=0 // pred_check
    _
  $region7: #{res_convdown_forward.7} parent=0 // pred_check_branch
    %14 = sbr.rel (0) target = $region9
  $region8: #{res_convdown_forward.7} parent=0 // pred_region
    _
  $region9: #{res_convdown_forward.7} parent=0 // pred_fallthru
    _
  // Predicated region
  $region10: #{res_convdown_forward.7} parent=0 // pred_check
    _
  $region11: #{res_convdown_forward.7} parent=0 // pred_check_branch
    %16 = sbr.rel (0) target = $region13
  $region12: #{res_convdown_forward.7} parent=0 // pred_region
    _
  $region13: #{res_convdown_forward.7} parent=0 // pred_fallthru
    _
  // Predicated region
  $region14: #{res_convdown_forward.7} parent=0 // pred_check
    _
  $region15: #{res_convdown_forward.7} parent=0 // pred_check_branch
    %18 = sbr.rel (0) target = $region17
  $region16: #{res_convdown_forward.7} parent=0 // pred_region
    _
  $region17: #{res_convdown_forward.7} parent=0 // pred_fallthru
    _
  // Predicated region
  $region18: #{res_convdown_forward.7} parent=0 // pred_check
    _
  $region19: #{res_convdown_forward.7} parent=0 // pred_check_branch
    %20 = sbr.rel (0) target = $region21
  $region20: #{res_convdown_forward.7} parent=0 // pred_region
    _
  $region21: #{res_convdown_forward.7} parent=0 // pred_fallthru
    _
  // Predicated region
  $region22: #{res_convdown_forward.7} parent=0 // pred_check
    _
  $region23: #{res_convdown_forward.7} parent=0 // pred_check_branch
    %22 = sbr.rel (0) target = $region25
  $region24: #{res_convdown_forward.7} parent=0 // pred_region
    _
  $region25: #{res_convdown_forward.7} parent=0 // pred_fallthru
    _
  %v23 = vld [vmem:[%s2] sm:$0xff]
  %v24 = vld [vmem:[%s1] sm:$0xff]
  %v25 = vld [vmem:[%s3] sm:$0xff]
  %27 = vset.pattern.permute.xlu0 0
  %28 = vperm.xlu0 %27, %v25
  %v29 = vpop.permute.xlu0 %28
  %vm31 = vcmask 64512
  %v33 = vsel %vm31, %v23, 0
  %35 = vmatpush.msra.mxu0 0.0
  %36 = vmatpush.msra.mxu0 0.0
  %37 = vmatpush.msra.mxu0 0.0
  %38 = vmatpush.msra.mxu0 0.0
  %39 = vmatpush.msra.mxu0 0.0
  %40 = vmatpush.msra.mxu0 0.0
  %41 = vmatpush.msra.mxu0 0.0
  %42 = vmatpush.msra.mxu0 0.0
  %43 = vmatpush.msra.mxu0 0.0
  %44 = vmatpush.msra.mxu0 0.0
  %45 = vmatpush.msra.mxu0 0.0
  %46 = vmatpush.msra.mxu0 0.0
  %47 = vmatpush.msra.mxu0 0.0
  %48 = vmatpush.msra.mxu0 0.0
  %49 = vmatpush.msra.mxu0 0.0
  %50 = vmatpush.msra.mxu0 %v24
  %51 = vmatmul.f32.gmra.mxu0 %v33
  %v52 = vpop.f32.mrf.mxu0
  %v53 = vadd.f32 %v29, %v52
  %54 = vdwg.mxu0
  %v55 = vld [vmem:[%s0] sm:$0xff]
  %v56 = vld [vmem:[%s4] sm:$0xff]
  %58 = vset.pattern.permute.xlu0 0
  %59 = vperm.xlu0 %58, %v56
  %v60 = vpop.permute.xlu0 %59
  %v62 = vmul.f32 %v55, %v60
  %v63 = vld [vmem:[%s5] sm:$0xff]
  %65 = vset.pattern.permute.xlu0 0
  %66 = vperm.xlu0 %65, %v63
  %v67 = vpop.permute.xlu0 %66
  %v69 = vadd.f32 %v62, %v67
  %v70 = vadd.f32 %v69, %v53
  %v71 = vmax.f32 %v70, 0.0
  %72 = vst [vmem:[%s6] sm:$0xff] %v71
  // Predicated region
  $region26: #{res_convdown_forward.7} parent=0 // pred_check
    _
  $region27: #{res_convdown_forward.7} parent=0 // pred_check_branch
    %74 = sbr.rel (0) target = $region29
  $region28: #{res_convdown_forward.7} parent=0 // pred_region
    _
  $region29: #{res_convdown_forward.7} parent=0 // pred_fallthru
    _
  // Predicated region
  $region30: #{res_convdown_forward.7} parent=0 // pred_check
    _
  $region31: #{res_convdown_forward.7} parent=0 // pred_check_branch
    %76 = sbr.rel (0) target = $region33
  $region32: #{res_convdown_forward.7} parent=0 // pred_region
    _
  $region33: #{res_convdown_forward.7} parent=0 // pred_fallthru
    _

</llo_original>
